<compile_context>
chip_gen: v6e
topology: v6e:2x2x1
jax: 0.10.0
libtpu: 0.0.40
codegen_flags: <defaults>
</compile_context>

<pallas_src>
import functools

import jax
import jax.numpy as jnp
from jax.experimental import pallas as pl
from jax.experimental.pallas import tpu as pltpu


def _logit_kernel(xT_ref, w_ref, b_ref, out_ref):
    """Lane-dense linear projection: out[0, m] = sum_f xT[f, m] * w[f] + b.

    xT_ref : (F, TM) VMEM  features, hypotheses on the lane axis
    w_ref  : (F,)    SMEM  weight row as scalars
    b_ref  : (1,)    SMEM  bias scalar
    out_ref: (1, TM) VMEM  lane-dense logits
    """
    F = xT_ref.shape[0]
    acc = xT_ref[0:1, :] * w_ref[0]              # VPU scalar FMA per feature row
    for f in range(1, F):                        # F static -> unrolled
        acc = acc + xT_ref[f:f + 1, :] * w_ref[f]
    out_ref[...] = (acc + b_ref[0]).astype(out_ref.dtype)


def _fused_kernel(xT_ref, lab_ref, w_ref, b_ref, logit_ref, loss_ref, *, N, C, tile_m):
    """Linear projection + sigmoid + hinge with the loss reduction fused in-kernel.

    loss_ref is a (1, 1) output resident across the (reduction) grid axis.
    """
    i = pl.program_id(0)
    F = xT_ref.shape[0]

    @pl.when(i == 0)
    def _():
        loss_ref[...] = jnp.zeros_like(loss_ref)

    acc = xT_ref[0:1, :] * w_ref[0]
    for f in range(1, F):
        acc = acc + xT_ref[f:f + 1, :] * w_ref[f]
    logit = acc + b_ref[0]                       # (1, TM), lane-dense
    logit_ref[...] = logit.astype(logit_ref.dtype)

    # hinge: mean(clamp(1 - labels*sigmoid(logit), 0)); torch's labels[labels==0]=-1
    score = 1.0 / (1.0 + jnp.exp(-logit))        # EUP exp + reciprocal
    lab = lab_ref[...]
    lbl = jnp.where(lab == 0.0, -1.0, lab)
    hinge = jnp.maximum(1.0 - lbl * score, 0.0)

    # Mask the ragged tail of the last tile so garbage lanes don't corrupt the mean.
    lane = jax.lax.broadcasted_iota(jnp.int32, hinge.shape, 1)
    valid = (i * tile_m + lane) < N
    partial = jnp.sum(jnp.where(valid, hinge, 0.0))
    loss_ref[...] = loss_ref[...] + partial

    @pl.when(i == pl.num_programs(0) - 1)
    def _():
        wsq = w_ref[0] * w_ref[0]
        for f in range(1, F):
            wsq = wsq + w_ref[f] * w_ref[f]
        loss_ref[...] = loss_ref[...] * (1.0 / N) + C * wsq * 0.5


def linear_svm_forward(feature, nBestIndex=None, labels=None, *, weight, bias,
                       C=1.0, margin=0.0, tile_m=4096, feature_is_transposed=True):
    """Pallas-backed LinearSVM forward.

    feature: (F, N) float32 when feature_is_transposed=True (preferred zero-copy
             layout — produce it upstream); (N, F) torch layout otherwise (transposed
             once here as a fallback, costing one extra HBM pass).
    weight : (1, F) float32  (torch nn.Linear(F, 1).weight layout)
    bias   : (1,)   float32
    Returns {'logit': (N, 1), 'loss': None | scalar}.
    nBestIndex and margin are accepted for API parity but unused by forward().
    """
    if feature_is_transposed:
        xT = jnp.asarray(feature, jnp.float32)
    else:
        xT = jnp.asarray(feature, jnp.float32).T   # fallback; prefer (F, N) upstream
    F, N = xT.shape

    w = jnp.asarray(weight, jnp.float32).reshape(F)   # SMEM scalars
    b = jnp.asarray(bias, jnp.float32).reshape(1)

    # Lane-dense tile width: multiple of 128, capped at round_up(N, 128) so small N
    # runs as a single tile (no per-step overhead).
    tm = max(128, (min(int(tile_m), ((N + 127) // 128) * 128) // 128) * 128)
    n_tiles = pl.cdiv(N, tm)

    if labels is None:
        logit_row = pl.pallas_call(
            _logit_kernel,
            out_shape=jax.ShapeDtypeStruct((1, N), jnp.float32),
            grid=(n_tiles,),
            in_specs=[
                pl.BlockSpec((F, tm), lambda i: (0, i)),               # feature tile
                pl.BlockSpec(memory_space=pltpu.MemorySpace.SMEM),     # weights
                pl.BlockSpec(memory_space=pltpu.MemorySpace.SMEM),     # bias
            ],
            out_specs=pl.BlockSpec((1, tm), lambda i: (0, i)),         # lane-dense logits
            compiler_params=pltpu.CompilerParams(
                dimension_semantics=("parallel",)),
        )(xT, w, b)
        # (1, N) -> (N, 1): same contiguous data, free metadata reshape.
        return {"logit": logit_row.reshape(N, 1), "loss": None}

    labels_row = jnp.asarray(labels, jnp.float32).reshape(1, N)
    logit_row, loss_arr = pl.pallas_call(
        functools.partial(_fused_kernel, N=N, C=float(C), tile_m=tm),
        out_shape=(jax.ShapeDtypeStruct((1, N), jnp.float32),
                   jax.ShapeDtypeStruct((1, 1), jnp.float32)),
        grid=(n_tiles,),
        in_specs=[
            pl.BlockSpec((F, tm), lambda i: (0, i)),                   # feature tile
            pl.BlockSpec((1, tm), lambda i: (0, i)),                   # labels tile
            pl.BlockSpec(memory_space=pltpu.MemorySpace.SMEM),         # weights
            pl.BlockSpec(memory_space=pltpu.MemorySpace.SMEM),         # bias
        ],
        out_specs=(pl.BlockSpec((1, tm), lambda i: (0, i)),            # logits
                   pl.BlockSpec((1, 1), lambda i: (0, 0))),            # loss accumulator
        compiler_params=pltpu.CompilerParams(
            # Loss accumulates across the grid axis -> reduction.
            # TODO(synk): for very large N on v7x, add a leading size-2 "parallel"
            # axis with per-core partial losses to use both TensorCores.
            dimension_semantics=("arbitrary",)),
    )(xT, labels_row, w, b)
    return {"logit": logit_row.reshape(N, 1), "loss": loss_arr.reshape(())}


if __name__ == "__main__":
    feature_num = 4        # ensemble scores per hypothesis
    N = 1000               # not a multiple of 128 -> exercises the ragged tail path
    C = 1.0

    key = jax.random.PRNGKey(0)
    k_x, k_w, k_b, k_l = jax.random.split(key, 4)
    # Features produced directly in the (F, N) lane-dense layout the kernel consumes
    # (no wrapper-side transpose / pad / slice).
    featureT = jax.random.normal(k_x, (feature_num, N), jnp.float32)
    bound = 1.0 / jnp.sqrt(jnp.float32(feature_num))
    weight = jax.random.uniform(k_w, (1, feature_num), jnp.float32, -bound, bound)
    bias = jax.random.uniform(k_b, (1,), jnp.float32, -bound, bound)
    nBestIndex = None      # unused by forward()

    ref_logit = featureT.T @ weight.T + bias                     # (N, 1)

    # labels=None path (logit only, loss=None)
    out = linear_svm_forward(featureT, nBestIndex, labels=None,
                             weight=weight, bias=bias, C=C)
    logit = jax.block_until_ready(out["logit"])
    assert logit.shape == (N, 1)
    assert out["loss"] is None
    assert jnp.allclose(logit, ref_logit, atol=1e-5, rtol=1e-5), "logit mismatch"

    # labels path: fused hinge loss + L2, checked at single-tile and multi-tile sizes.
    labels = (jax.random.uniform(k_l, (N,)) > 0.5).astype(jnp.float32)
    score_ref = jax.nn.sigmoid(ref_logit[:, 0])
    lbl_ref = jnp.where(labels == 0, -1.0, labels)
    loss_ref = jnp.mean(jnp.maximum(1.0 - lbl_ref * score_ref, 0.0))
    loss_ref = loss_ref + C * (weight.reshape(-1) @ weight.reshape(-1)) / 2.0

    for tm in (4096, 256):   # 4096 -> single 1024-lane tile; 256 -> 4 tiles, ragged tail
        out2 = linear_svm_forward(featureT, nBestIndex, labels=labels,
                                  weight=weight, bias=bias, C=C, tile_m=tm)
        loss = jax.block_until_ready(out2["loss"])
        assert jnp.allclose(out2["logit"], ref_logit, atol=1e-5, rtol=1e-5), "logit mismatch"
        assert jnp.allclose(loss, loss_ref, atol=1e-5, rtol=1e-5), f"loss mismatch (tm={tm})"

    print("KERNEL_OK")
</pallas_src>

<mosaic_0001>
module attributes {stable_mosaic.version = 11 : i64} {
  func.func @_logit_kernel(%arg0: i32, %arg1: memref<4x1024xf32, #tpu.memory_space<vmem>>, %arg2: memref<4xf32, #tpu.memory_space<smem>>, %arg3: memref<1xf32, #tpu.memory_space<smem>>, %arg4: memref<1x1024xf32, #tpu.memory_space<vmem>>) attributes {dimension_semantics = [#tpu.dimension_semantics<parallel>], iteration_bounds = array<i64: 1>, scalar_prefetch = 0 : i64, scratch_operands = 0 : i64, tpu.core_type = #tpu.core_type<tc>, window_params = [{transform_indices = @transform_0, window_bounds = array<i64: 4, 1024>}, {transform_indices = @transform_1, window_bounds = array<i64: 4>}, {transform_indices = @transform_2, window_bounds = array<i64: 1>}, {transform_indices = @transform_3, window_bounds = array<i64: 1, 1024>}]} {
    %c0 = arith.constant 0 : index
    %c0_0 = arith.constant 0 : index
    %0 = vector.load %arg1[%c0, %c0_0] : memref<4x1024xf32, #tpu.memory_space<vmem>>, vector<1x1024xf32>
    %c0_1 = arith.constant 0 : index
    %1 = memref.load %arg2[%c0_1] : memref<4xf32, #tpu.memory_space<smem>>
    %2 = vector.broadcast %1 : f32 to vector<1x1024xf32>
    %3 = arith.mulf %0, %2 : vector<1x1024xf32>
    %c1 = arith.constant 1 : index
    %c0_2 = arith.constant 0 : index
    %4 = vector.load %arg1[%c1, %c0_2] : memref<4x1024xf32, #tpu.memory_space<vmem>>, vector<1x1024xf32>
    %c1_3 = arith.constant 1 : index
    %5 = memref.load %arg2[%c1_3] : memref<4xf32, #tpu.memory_space<smem>>
    %6 = vector.broadcast %5 : f32 to vector<1x1024xf32>
    %7 = arith.mulf %4, %6 : vector<1x1024xf32>
    %8 = arith.addf %3, %7 : vector<1x1024xf32>
    %c2 = arith.constant 2 : index
    %c0_4 = arith.constant 0 : index
    %9 = vector.load %arg1[%c2, %c0_4] : memref<4x1024xf32, #tpu.memory_space<vmem>>, vector<1x1024xf32>
    %c2_5 = arith.constant 2 : index
    %10 = memref.load %arg2[%c2_5] : memref<4xf32, #tpu.memory_space<smem>>
    %11 = vector.broadcast %10 : f32 to vector<1x1024xf32>
    %12 = arith.mulf %9, %11 : vector<1x1024xf32>
    %13 = arith.addf %8, %12 : vector<1x1024xf32>
    %c3 = arith.constant 3 : index
    %c0_6 = arith.constant 0 : index
    %14 = vector.load %arg1[%c3, %c0_6] : memref<4x1024xf32, #tpu.memory_space<vmem>>, vector<1x1024xf32>
    %c3_7 = arith.constant 3 : index
    %15 = memref.load %arg2[%c3_7] : memref<4xf32, #tpu.memory_space<smem>>
    %16 = vector.broadcast %15 : f32 to vector<1x1024xf32>
    %17 = arith.mulf %14, %16 : vector<1x1024xf32>
    %18 = arith.addf %13, %17 : vector<1x1024xf32>
    %c0_8 = arith.constant 0 : index
    %19 = memref.load %arg3[%c0_8] : memref<1xf32, #tpu.memory_space<smem>>
    %20 = vector.broadcast %19 : f32 to vector<1x1024xf32>
    %21 = arith.addf %18, %20 : vector<1x1024xf32>
    %c0_9 = arith.constant 0 : index
    %c0_10 = arith.constant 0 : index
    %22 = vector.load %arg4[%c0_9, %c0_10] : memref<1x1024xf32, #tpu.memory_space<vmem>>, vector<1x1024xf32>
    tpu.vector_store %arg4[%c0_9, %c0_10], %21 {strides = array<i32>} : memref<1x1024xf32, #tpu.memory_space<vmem>>, vector<1x1024xf32>,
    return
  }
  func.func @transform_0(%arg0: i32) -> (i32, i32) {
    %c0_i32 = arith.constant 0 : i32
    %c0_i32_0 = arith.constant 0 : i32
    return %c0_i32, %arg0 : i32, i32
  }
  func.func @transform_1(%arg0: i32) -> i32 {
    %c0_i32 = arith.constant 0 : i32
    %c0_i32_0 = arith.constant 0 : i32
    return %c0_i32 : i32
  }
  func.func @transform_2(%arg0: i32) -> i32 {
    %c0_i32 = arith.constant 0 : i32
    %c0_i32_0 = arith.constant 0 : i32
    return %c0_i32 : i32
  }
  func.func @transform_3(%arg0: i32) -> (i32, i32) {
    %c0_i32 = arith.constant 0 : i32
    %c0_i32_0 = arith.constant 0 : i32
    return %c0_i32, %arg0 : i32, i32
  }
}

</mosaic_0001>

<llo_original>
// kernel: tpu_custom_call.1
$region0: #{tpu_custom_call.1}
  #allocation0 [shape = 'u32[]', space=smem, size = 0x4, offset = 0x4, fixed_abs, tag = 'smem constant byte address 0x4 - core index']
  #allocation1 [shape = 'u32[144,128]{1,0:T(1,128)}', space=vmem, size = 0x12000, scoped, tag = 'internal scratch']
  #allocation2 [shape = 'f32[1]{0:T(128)S(6)}', space=smem, size = 0x200, scoped, tag = 'scoped memory for tpu_custom_call.1']
  %s0 = inlined_call_operand.hbm [shape: f32[4,1000], index: 0, kind: input, shape index: {}]
  %s1 = inlined_call_operand.vmem [shape: f32[4], index: 1, kind: input, shape index: {}]
  %s2 = inlined_call_operand.<no memory space> [shape: f32[1], index: 2, kind: input, shape index: {}]
  %s3 = inlined_call_operand.hbm [shape: f32[1,1000], index: 3, kind: output, shape index: {}]
  %s4 = sld [smem:[#allocation0]]
  $region30: #{tpu_custom_call.1} parent=0
    _
  %s6 = ssub.s32 1, %s4
  %s7 = scalar_select 0, %s6, %s4
  %8 = sst [smem:[#allocation2]] %s2
  $region1: #{tpu_custom_call.1} parent=0
    #allocation3 [shape = 'u8[16384]{0}', space=vmem, size = 0x4000, scoped, tag = 'input window, operand 0, single buffered']
    #allocation4 [shape = 's32[1]{0}', space=sflag, size = 0x4, scoped, tag = 'scoped memory for tpu_custom_call.1']
    #allocation5 [shape = 's32[1]{0}', space=sflag, size = 0x4, scoped, tag = 'scoped memory for tpu_custom_call.1']
    #allocation6 [shape = 's32[1]{0}', space=sflag, size = 0x4, scoped, tag = 'scoped memory for tpu_custom_call.1']
    #allocation7 [shape = 'u8[512]{0}', space=smem, size = 0x200, scoped, tag = 'input window, operand 1, single buffered']
    #allocation8 [shape = 'u8[4096]{0}', space=vmem, size = 0x1000, scoped, tag = 'output window, operand 0, single buffered']
    %9 = vsyncpa [#allocation4], 0
    %10 = vsyncpa [#allocation6], 0
    %11 = vsyncpa [#allocation5], 0
    // Predicated region
    $region2: #{tpu_custom_call.1} parent=1 // pred_check
      _
    $region3: #{tpu_custom_call.1} parent=1 // pred_check_branch
      %13 = sbr.rel (0) target = $region5
    $region4: #{tpu_custom_call.1} parent=1 // pred_region
      %s15 = ssub.s32 512, 512
      %16 = vsyncadd [#allocation4], %s15
      %s18 = sshll.u32 [#allocation3], 4
      %s19 = int_to_ptr.vmem [resolvable:$true] %s18
      %21 = dma.hbm_to_vmem [thread:$0]  %s0, 512, %s19, [#allocation4]
    $region5: #{tpu_custom_call.1} parent=1 // pred_fallthru
      _
    // Predicated region
    $region6: #{tpu_custom_call.1} parent=1 // pred_check
      _
    $region7: #{tpu_custom_call.1} parent=1 // pred_check_branch
      %23 = sbr.rel (0) target = $region9
    $region8: #{tpu_custom_call.1} parent=1 // pred_region
      %s25 = ssub.s32 16, 16
      %26 = vsyncadd [#allocation6], %s25
      %s28 = sshll.u32 %s1, 4
      %s29 = int_to_ptr.vmem [resolvable:$true] %s28
      %31 = dma.vmem_to_smem %s29, 16, [#allocation7], [#allocation6]
    $region9: #{tpu_custom_call.1} parent=1 // pred_fallthru
      _
    // Predicated region
    $region10: #{tpu_custom_call.1} parent=1 // pred_check
      _
    $region11: #{tpu_custom_call.1} parent=1 // pred_check_branch
      %33 = sbr.rel (0) target = $region13
    $region12: #{tpu_custom_call.1} parent=1 // pred_region
      _
    $region13: #{tpu_custom_call.1} parent=1 // pred_fallthru
      _
    // Predicated region
    $region14: #{tpu_custom_call.1} parent=1 // pred_check
      _
    $region15: #{tpu_custom_call.1} parent=1 // pred_check_branch
      %35 = sbr.rel (0) target = $region17
    $region16: #{tpu_custom_call.1} parent=1 // pred_region
      %36 = dma.done [#allocation4], 512
    $region17: #{tpu_custom_call.1} parent=1 // pred_fallthru
      _
    // Predicated region
    $region18: #{tpu_custom_call.1} parent=1 // pred_check
      _
    $region19: #{tpu_custom_call.1} parent=1 // pred_check_branch
      %38 = sbr.rel (0) target = $region21
    $region20: #{tpu_custom_call.1} parent=1 // pred_region
      %39 = dma.done [#allocation6], 16
    $region21: #{tpu_custom_call.1} parent=1 // pred_fallthru
      _
    %40 = sfence
    %v41 = vld [vmem:[#allocation3] ss:$4 sm:$0xff]
    %s42 = sld [smem:[#allocation7]]
    %v43 = vstv %s42
    %v44 = vmul.f32 %v41, %v43
    %s45 = scalar_lea.vmem [#allocation3], 1
    %v46 = vld [vmem:[%s45] ss:$4 sm:$0xff]
    %s47 = sld [smem:[#allocation7 + $0x1]]
    %v48 = vstv %s47
    %v49 = vmul.f32 %v46, %v48
    %v50 = vadd.f32 %v44, %v49
    %s51 = scalar_lea.vmem [#allocation3], 2
    %v52 = vld [vmem:[%s51] ss:$4 sm:$0xff]
    %s53 = sld [smem:[#allocation7 + $0x2]]
    %v54 = vstv %s53
    %v55 = vmul.f32 %v52, %v54
    %v56 = vadd.f32 %v50, %v55
    %s57 = scalar_lea.vmem [#allocation3], 3
    %v58 = vld [vmem:[%s57] ss:$4 sm:$0xff]
    %s59 = sld [smem:[#allocation7 + $0x3]]
    %v60 = vstv %s59
    %v61 = vmul.f32 %v58, %v60
    %v62 = vadd.f32 %v56, %v61
    %s63 = sld [smem:[#allocation2]]
    %v64 = vstv %s63
    %v65 = vadd.f32 %v62, %v64
    %66 = vst [vmem:[#allocation8] sm:$0xff] %v65
    // Predicated region
    $region22: #{tpu_custom_call.1} parent=1 // pred_check
      _
    $region23: #{tpu_custom_call.1} parent=1 // pred_check_branch
      %68 = sbr.rel (0) target = $region25
    $region24: #{tpu_custom_call.1} parent=1 // pred_region
      %s70 = ssub.s32 128, 128
      %71 = vsyncadd [#allocation5], %s70
      %s73 = sshll.u32 [#allocation8], 4
      %s74 = int_to_ptr.vmem [resolvable:$true] %s73
      %76 = dma.vmem_to_hbm [thread:$0]  %s74, 128, %s3, [#allocation5]
    $region25: #{tpu_custom_call.1} parent=1 // pred_fallthru
      _
    // Predicated region
    $region26: #{tpu_custom_call.1} parent=1 // pred_check
      _
    $region27: #{tpu_custom_call.1} parent=1 // pred_check_branch
      %78 = sbr.rel (0) target = $region29
    $region28: #{tpu_custom_call.1} parent=1 // pred_region
      %79 = dma.done [#allocation5], 128
    $region29: #{tpu_custom_call.1} parent=1 // pred_fallthru
      _
    %80 = vsyncpa [#allocation4], 1
    %81 = vsyncpa [#allocation5], 1
    %82 = vsyncpa [#allocation6], 1

</llo_original>
